<compile_context>
chip_gen: v6e
topology: v6e:2x2x1
jax: 0.10.0
libtpu: 0.0.40
codegen_flags: <defaults>
</compile_context>

<pallas_src>
import math
import functools

import jax
import jax.numpy as jnp
from jax.experimental import pallas as pl
from jax.experimental.pallas import tpu as pltpu


def _round_up(a: int, m: int) -> int:
    return ((a + m - 1) // m) * m


def make_positional_encoding(d_model: int, max_len: int, dtype=jnp.float32):
    """Deterministic sinusoidal table, identical to the PyTorch __init__."""
    position = jnp.arange(max_len, dtype=jnp.float32)[:, None]                        # (L, 1)
    div_term = jnp.exp(
        jnp.arange(0, d_model, 2, dtype=jnp.float32) * (-math.log(10000.0) / d_model)
    )                                                                                 # (D/2,)
    angles = position * div_term                                                      # (L, D/2)
    pe = jnp.zeros((max_len, d_model), dtype=jnp.float32)
    pe = pe.at[:, 0::2].set(jnp.sin(angles))
    pe = pe.at[:, 1::2].set(jnp.cos(angles))
    return pe.astype(dtype)                                                           # (L, D)


def _pe_kernel(seed_ref, x_ref, pe_ref, o_ref, *, p: float, training: bool,
               strides, grid_blocks):
    x = x_ref[...]
    pe = pe_ref[...]
    if pe.ndim == x.ndim:
        y = x + pe                       # folded / lane-dense path: identical block shapes
    else:
        y = x + pe[:, None, :]           # (tS, D) broadcast over the batch axis

    if training and p >= 1.0:
        y = jnp.zeros_like(y)            # nn.Dropout(p=1.0) zeros everything
    elif training and p > 0.0:
        # Inverted dropout: keep with prob 1-p, scale survivors by 1/(1-p).
        # Mask = splitmix32 hash of (global element index, seed): portable (no TPU-only
        # PRNG primitives), independent of the tiling, no extra HBM traffic.
        # TODO(synk): matches torch.nn.Dropout's distribution, not its exact RNG bits.
        idx = None
        for ax in range(x.ndim):
            it = jax.lax.broadcasted_iota(jnp.int32, x.shape, ax)
            if ax < len(grid_blocks):
                it = it + pl.program_id(ax) * grid_blocks[ax]
            part = it * jnp.int32(strides[ax])
            idx = part if idx is None else idx + part
        h = idx.astype(jnp.uint32) + seed_ref[0].astype(jnp.uint32) * jnp.uint32(0x9E3779B9)
        h = (h ^ (h >> 16)) * jnp.uint32(0x7FEB352D)
        h = (h ^ (h >> 15)) * jnp.uint32(0x846CA68B)
        h = h ^ (h >> 16)
        threshold = jnp.uint32(min(int(round(p * float(1 << 32))), (1 << 32) - 1))
        keep = h >= threshold                               # P(keep) = 1 - p
        scale = jnp.asarray(1.0 / (1.0 - p), dtype=y.dtype)
        y = jnp.where(keep, y * scale, jnp.zeros_like(y))

    o_ref[...] = y.astype(o_ref.dtype)


def positional_encoding_forward(x, pe, *, p: float = 0.1, training: bool = False,
                                seed: int = 0, block_bytes: int | None = None,
                                donate_x: bool = False):
    """x: (S, B, D); pe: (max_len, D). Returns dropout(x + pe[:S, None, :])."""
    S, B, D = x.shape
    L, D_pe = pe.shape
    assert D_pe == D and L >= S, "pe table must cover the sequence length"

    dtype = x.dtype
    itemsize = jnp.dtype(dtype).itemsize
    sub = {4: 8, 2: 16, 1: 32}.get(itemsize, 8)     # min sublane tile per dtype width
    pe = pe.astype(dtype)                            # cast once (halves pe DMA for bf16)

    train_drop = bool(training) and p > 0.0
    if block_bytes is None:
        # HBM-bandwidth bound elementwise kernel: large tiles amortize the ~0.35us/step
        # overhead. ~6 MiB x-blocks (double-buffered x+out ~= 24 MiB) for eval, ~3 MiB
        # when training so the uint32 hash temporaries still fit.
        # (v5e: pass ~3-4 MiB; v6e/v7x: 6-8 MiB.)
        block_bytes = (3 << 20) if train_drop else (6 << 20)

    row_bytes = B * D * itemsize                     # one full-batch sequence row
    s_cap = _round_up(S, sub)

    # block_s: floor-align to the sublane multiple AFTER the budget division so we never
    # overshoot the byte budget, then clamp to the (padded) sequence length.
    block_s = min(s_cap, max(sub, (block_bytes // max(row_bytes, 1)) // sub * sub))

    # Prefer an even number of S-steps so v7x's two TensorCores split the grid evenly.
    n_s = -(-S // block_s)
    if n_s > 1 and n_s % 2 == 1:
        alt = max(sub, _round_up(-(-S // (n_s + 1)), sub))
        if alt <= block_s and (-(-S // alt)) % 2 == 0:
            block_s = alt

    # Lane-dense output path: when D underfills the 128 lanes, fold (B, D) -> B*D so the
    # output stores are unmasked. pe is tiled across B for this path only (cheap: D < 128).
    fold = (D < 128) and (sub * row_bytes <= block_bytes)

    block_b = B
    if not fold and sub * row_bytes > block_bytes and B > sub:
        # Very wide rows: split the batch axis instead of blowing the VMEM budget.
        bb = (block_bytes // max(sub * D * itemsize, 1)) // sub * sub
        block_b = min(B, max(sub, bb))

    # Explicit scoped-VMEM request: double-buffered x-in + out blocks, pe blocks, and
    # headroom for the uint32 hash temporaries when training. Capped at 48 MiB so it
    # stays inside v7x's 64 MiB physical VMEM (and raises v5e's 16 MiB scoped default).
    if fold:
        x_blk = block_s * B * D * itemsize
        pe_blk = x_blk
    else:
        x_blk = block_s * block_b * D * itemsize
        pe_blk = block_s * D * itemsize
    vmem = 2 * (2 * x_blk) + 2 * pe_blk
    if train_drop:
        vmem += 4 * (x_blk // itemsize) * 4
    vmem_limit = min(48 << 20, max(16 << 20, int(vmem * 1.25) + (1 << 20)))

    seed_arr = jnp.asarray([seed], dtype=jnp.int32)
    alias = {1: 0} if donate_x else {}               # seed is input 0, x is input 1

    if fold:
        xf = x.reshape(S, B * D)
        pef = jnp.tile(pe, (1, B))                   # (L, B*D): pe row repeated per batch
        kernel = functools.partial(_pe_kernel, p=float(p), training=bool(training),
                                   strides=(B * D, 1), grid_blocks=(block_s,))
        grid_spec = pltpu.PrefetchScalarGridSpec(
            num_scalar_prefetch=1,                   # dropout seed lands in SMEM
            grid=(pl.cdiv(S, block_s),),
            in_specs=[pl.BlockSpec((block_s, B * D), lambda i, seed_ref: (i, 0)),
                      pl.BlockSpec((block_s, B * D), lambda i, seed_ref: (i, 0))],
            out_specs=pl.BlockSpec((block_s, B * D), lambda i, seed_ref: (i, 0)),
        )
        out = pl.pallas_call(
            kernel,
            out_shape=jax.ShapeDtypeStruct((S, B * D), dtype),
            grid_spec=grid_spec,
            compiler_params=pltpu.CompilerParams(
                dimension_semantics=("parallel",),   # elementwise: no reduction axis
                vmem_limit_bytes=vmem_limit),
            input_output_aliases=alias,
        )(seed_arr, xf, pef)
        return out.reshape(S, B, D)

    kernel = functools.partial(_pe_kernel, p=float(p), training=bool(training),
                               strides=(B * D, D, 1), grid_blocks=(block_s, block_b))
    grid_spec = pltpu.PrefetchScalarGridSpec(
        num_scalar_prefetch=1,
        grid=(pl.cdiv(S, block_s), pl.cdiv(B, block_b)),
        in_specs=[pl.BlockSpec((block_s, block_b, D), lambda i, j, seed_ref: (i, j, 0)),
                  # window straight into the persistent (max_len, D) table
                  pl.BlockSpec((block_s, D), lambda i, j, seed_ref: (i, 0))],
        out_specs=pl.BlockSpec((block_s, block_b, D), lambda i, j, seed_ref: (i, j, 0)),
    )
    return pl.pallas_call(
        kernel,
        out_shape=jax.ShapeDtypeStruct((S, B, D), dtype),
        grid_spec=grid_spec,
        compiler_params=pltpu.CompilerParams(
            dimension_semantics=("parallel", "parallel"),
            vmem_limit_bytes=vmem_limit),
        input_output_aliases=alias,
    )(seed_arr, x, pe)


def _check(x, pe, *, p, seed, block_bytes):
    """Run eval + training mode and validate against the pure-JAX reference."""
    S = x.shape[0]
    ref = x + pe[:S][:, None, :]

    out = jax.block_until_ready(
        positional_encoding_forward(x, pe, p=p, training=False, block_bytes=block_bytes))
    assert out.shape == x.shape
    assert jnp.allclose(out, ref, atol=1e-6, rtol=1e-6), "mismatch vs eval reference"

    out_tr = jax.block_until_ready(
        positional_encoding_forward(x, pe, p=p, training=True, seed=seed,
                                    block_bytes=block_bytes))
    scaled_ref = ref * (1.0 / (1.0 - p))
    ok = jnp.isclose(out_tr, 0.0, atol=1e-6) | jnp.isclose(out_tr, scaled_ref,
                                                           rtol=1e-5, atol=1e-5)
    assert bool(jnp.all(ok)), "dropout output not in {0, ref/(1-p)}"
    n_zero = int(jnp.sum(jnp.abs(out_tr) < 1e-6))
    assert 0 < n_zero < out_tr.size, "dropout mask degenerate (all kept or all dropped)"


if __name__ == "__main__":
    key = jax.random.PRNGKey(0)

    # Small shapes consistent with the module: d_model=32, max_len=32, seq=16, batch=2.
    # D=32 < 128 -> exercises the folded lane-dense path; block_bytes=2048 -> block_s=8,
    # grid=(2,) so the tiled/pipelined path is actually used.
    d_model, max_len, seq, batch = 32, 32, 16, 2
    k1, k2 = jax.random.split(key)
    x = jax.random.normal(k1, (seq, batch, d_model), dtype=jnp.float32)
    pe = make_positional_encoding(d_model, max_len)
    _check(x, pe, p=0.5, seed=123, block_bytes=2048)

    # Lane-aligned d_model=128 -> exercises the 3-D broadcast path (grid over S and B).
    d_model2 = 128
    x2 = jax.random.normal(k2, (seq, batch, d_model2), dtype=jnp.float32)
    pe2 = make_positional_encoding(d_model2, max_len)
    _check(x2, pe2, p=0.5, seed=7, block_bytes=8192)

    print("KERNEL_OK")
</pallas_src>

<mosaic_0001>
module attributes {stable_mosaic.version = 11 : i64} {
  func.func @_pe_kernel(%arg0: i32, %arg1: memref<1xi32, #tpu.memory_space<smem>>, %arg2: memref<8x64xf32, #tpu.memory_space<vmem>>, %arg3: memref<8x64xf32, #tpu.memory_space<vmem>>, %arg4: memref<8x64xf32, #tpu.memory_space<vmem>>) attributes {dimension_semantics = [#tpu.dimension_semantics<parallel>], iteration_bounds = array<i64: 2>, scalar_prefetch = 1 : i64, scratch_operands = 0 : i64, tpu.core_type = #tpu.core_type<tc>, window_params = [{transform_indices = @transform_0, window_bounds = array<i64: 8, 64>}, {transform_indices = @transform_1, window_bounds = array<i64: 8, 64>}, {transform_indices = @transform_2, window_bounds = array<i64: 8, 64>}]} {
    %c0 = arith.constant 0 : index
    %c0_0 = arith.constant 0 : index
    %0 = vector.load %arg2[%c0, %c0_0] : memref<8x64xf32, #tpu.memory_space<vmem>>, vector<8x64xf32>
    %c0_1 = arith.constant 0 : index
    %c0_2 = arith.constant 0 : index
    %1 = vector.load %arg3[%c0_1, %c0_2] : memref<8x64xf32, #tpu.memory_space<vmem>>, vector<8x64xf32>
    %2 = arith.addf %0, %1 : vector<8x64xf32>
    %c0_3 = arith.constant 0 : index
    %c0_4 = arith.constant 0 : index
    %3 = vector.load %arg4[%c0_3, %c0_4] : memref<8x64xf32, #tpu.memory_space<vmem>>, vector<8x64xf32>
    tpu.vector_store %arg4[%c0_3, %c0_4], %2 {strides = array<i32>} : memref<8x64xf32, #tpu.memory_space<vmem>>, vector<8x64xf32>,
    return
  }
  func.func @transform_0(%arg0: i32, %arg1: memref<1xi32, #tpu.memory_space<smem>>) -> (i32, i32) {
    %c0_i32 = arith.constant 0 : i32
    %c0_i32_0 = arith.constant 0 : i32
    return %arg0, %c0_i32 : i32, i32
  }
  func.func @transform_1(%arg0: i32, %arg1: memref<1xi32, #tpu.memory_space<smem>>) -> (i32, i32) {
    %c0_i32 = arith.constant 0 : i32
    %c0_i32_0 = arith.constant 0 : i32
    return %arg0, %c0_i32 : i32, i32
  }
  func.func @transform_2(%arg0: i32, %arg1: memref<1xi32, #tpu.memory_space<smem>>) -> (i32, i32) {
    %c0_i32 = arith.constant 0 : i32
    %c0_i32_0 = arith.constant 0 : i32
    return %arg0, %c0_i32 : i32, i32
  }
}

</mosaic_0001>

<llo_original>
// kernel: tpu_custom_call.1
$region0: #{tpu_custom_call.1}
  #allocation0 [shape = 'u32[]', space=smem, size = 0x4, offset = 0x4, fixed_abs, tag = 'smem constant byte address 0x4 - core index']
  #allocation1 [shape = 'u32[144,128]{1,0:T(1,128)}', space=vmem, size = 0x12000, scoped, tag = 'internal scratch']
  #allocation2 [shape = 's32[1]{0}', space=sflag, size = 0x4, scoped, tag = 'scoped memory for tpu_custom_call.1']
  #allocation3 [shape = 's32[1]{0:T(128)S(6)}', space=smem, size = 0x200, scoped, tag = 'prefetched SMEM operand 0']
  %s0 = inlined_call_operand.<no memory space> [shape: s32[1], index: 0, kind: input, shape index: {}]
  %s1 = inlined_call_operand.hbm [shape: f32[16,64], index: 1, kind: input, shape index: {}]
  %s2 = inlined_call_operand.hbm [shape: f32[32,64], index: 2, kind: input, shape index: {}]
  %s3 = inlined_call_operand.hbm [shape: f32[16,64], index: 3, kind: output, shape index: {}]
  %s4 = sld [smem:[#allocation0]]
  $region49: #{tpu_custom_call.1} parent=0
    _
  %s6 = ssub.s32 1, %s4
  %s7 = scalar_select 0, %s6, %s4
  %8 = sst [smem:[#allocation3]] %s0
  $region1: #{tpu_custom_call.1} parent=0
    #allocation4 [shape = 'u8[8192]{0}', space=vmem, size = 0x2000, scoped, tag = 'input window, operand 1']
    #allocation5 [shape = 's32[2]{0}', space=sflag, size = 0x8, scoped, tag = 'scoped memory for tpu_custom_call.1']
    #allocation6 [shape = 's32[2]{0}', space=sflag, size = 0x8, scoped, tag = 'scoped memory for tpu_custom_call.1']
    #allocation7 [shape = 'u8[8192]{0}', space=vmem, size = 0x2000, scoped, tag = 'input window, operand 2']
    #allocation8 [shape = 's32[2]{0}', space=sflag, size = 0x8, scoped, tag = 'scoped memory for tpu_custom_call.1']
    #allocation9 [shape = 'u8[8192]{0}', space=vmem, size = 0x2000, scoped, tag = 'output window, operand 0']
    %9 = vsyncpa [#allocation5], 0
    %s10 = scalar_lea.sflag [#allocation5], 1
    %11 = vsyncpa %s10, 0
    %12 = vsyncpa [#allocation8], 0
    %s13 = scalar_lea.sflag [#allocation8], 1
    %14 = vsyncpa %s13, 0
    %15 = vsyncpa [#allocation6], 0
    %s16 = scalar_lea.sflag [#allocation6], 1
    %17 = vsyncpa %s16, 0
    loop: start=0, step=1, limit=4
    $region2: #{tpu_custom_call.1} parent=1 // loop_pre_header
      _
    $region3: #{tpu_custom_call.1} parent=1 // loop_header
      %s19 = sphi 0, %s23
      %p20 = scmp.ge.s32.totalorder %s19, 4
      %s29 = sphi 0, %s31
      %s32 = sphi 0, %s29
      %s33 = sphi 0, %s32
      %s49 = sphi 0, %s33
      %s55 = sphi 0, %s57
      %s58 = sphi 0, %s55
      %s59 = sphi 0, %s58
      %s75 = sphi 0, %s59
      %s81 = sphi 0, %s83
      %s84 = sphi 0, %s81
      %s85 = sphi 0, %s84
      %s101 = sphi 0, %s85
    $region4: #{tpu_custom_call.1} parent=1 // loop_header_branch
      %22 = sbr.rel (%p20) target = $region8
    $region5: #{tpu_custom_call.1} parent=1 // loop_body
      %s24 = ssub.s32 %s19, 1
      %s25 = ssub.s32 %s19, 2
      %s26 = sadd.s32 %s19, 1
      %s27 = ssub.s32 %s19, %s26
      %p28 = scmp.eq.s32.totalorder %s27, 0
      %s30 = sadd.s32 %s29, 1
      %s31 = scalar_select %p28, %s29, %s30
      %p34 = pneg %p28
      %p35 = scmp.eq.s32.totalorder %s19, 1
      %p36 = por %p34, %p35
      %p37 = scmp.ne.s32.totalorder %s29, %s32
      %p38 = scmp.eq.s32.totalorder %s19, 0
      %p39 = por %p37, %p38
      %p40 = scmp.ne.s32.totalorder %s29, %s32
      %p41 = scmp.eq.s32.totalorder %s24, 1
      %p42 = por %p40, %p41
      %p43 = scmp.ne.s32.totalorder %s32, %s33
      %p44 = scmp.eq.s32.totalorder %s24, 0
      %p45 = por %p43, %p44
      %p46 = scmp.ne.s32.totalorder %s32, %s33
      %p47 = scmp.eq.s32.totalorder %s25, 1
      %p48 = por %p46, %p47
      %p50 = scmp.ne.s32.totalorder %s33, %s49
      %p51 = scmp.eq.s32.totalorder %s25, 0
      %p52 = por %p50, %p51
      %s53 = ssub.s32 %s19, %s26
      %p54 = scmp.eq.s32.totalorder %s53, 0
      %s56 = sadd.s32 %s55, 1
      %s57 = scalar_select %p54, %s55, %s56
      %p60 = pneg %p54
      %p61 = scmp.eq.s32.totalorder %s19, 1
      %p62 = por %p60, %p61
      %p63 = scmp.ne.s32.totalorder %s55, %s58
      %p64 = scmp.eq.s32.totalorder %s19, 0
      %p65 = por %p63, %p64
      %p66 = scmp.ne.s32.totalorder %s55, %s58
      %p67 = scmp.eq.s32.totalorder %s24, 1
      %p68 = por %p66, %p67
      %p69 = scmp.ne.s32.totalorder %s58, %s59
      %p70 = scmp.eq.s32.totalorder %s24, 0
      %p71 = por %p69, %p70
      %p72 = scmp.ne.s32.totalorder %s58, %s59
      %p73 = scmp.eq.s32.totalorder %s25, 1
      %p74 = por %p72, %p73
      %p76 = scmp.ne.s32.totalorder %s59, %s75
      %p77 = scmp.eq.s32.totalorder %s25, 0
      %p78 = por %p76, %p77
      %s79 = ssub.s32 %s19, %s26
      %p80 = scmp.eq.s32.totalorder %s79, 0
      %s82 = sadd.s32 %s81, 1
      %s83 = scalar_select %p80, %s81, %s82
      %p86 = pneg %p80
      %p87 = scmp.eq.s32.totalorder %s19, 1
      %p88 = por %p86, %p87
      %p89 = scmp.ne.s32.totalorder %s81, %s84
      %p90 = scmp.eq.s32.totalorder %s19, 0
      %p91 = por %p89, %p90
      %p92 = scmp.ne.s32.totalorder %s81, %s84
      %p93 = scmp.eq.s32.totalorder %s24, 1
      %p94 = por %p92, %p93
      %p95 = scmp.ne.s32.totalorder %s84, %s85
      %p96 = scmp.eq.s32.totalorder %s24, 0
      %p97 = por %p95, %p96
      %p98 = scmp.ne.s32.totalorder %s84, %s85
      %p99 = scmp.eq.s32.totalorder %s25, 1
      %p100 = por %p98, %p99
      %p102 = scmp.ne.s32.totalorder %s85, %s101
      %p103 = scmp.eq.s32.totalorder %s25, 0
      %p104 = por %p102, %p103
      %p105 = scmp.le.s32.totalorder 1, %s19
      %p106 = scmp.lt.s32.totalorder %s19, 3
      %p107 = pnand %p105, %p106
      %p108 = pneg %p107
      // Predicated region
      $region9: #{tpu_custom_call.1} parent=5 // pred_check
        _
      $region10: #{tpu_custom_call.1} parent=5 // pred_check_branch
        %110 = sbr.rel (%p107) target = $region12
      $region11: #{tpu_custom_call.1} parent=5 // pred_region
        %s111 = ssub.s32 %s19, 1
      $region12: #{tpu_custom_call.1} parent=5 // pred_fallthru
        _
      %p112 = scmp.lt.s32.totalorder %s19, 2
      // Predicated region
      $region13: #{tpu_custom_call.1} parent=5 // pred_check
        %p113 = pneg %p112
      $region14: #{tpu_custom_call.1} parent=5 // pred_check_branch
        %115 = sbr.rel (%p113) target = $region16
      $region15: #{tpu_custom_call.1} parent=5 // pred_region
        // Predicated region
        $region17: #{tpu_custom_call.1} parent=15 // pred_check
          %p116 = pneg %p39
        $region18: #{tpu_custom_call.1} parent=15 // pred_check_branch
          %118 = sbr.rel (%p116) target = $region20
        $region19: #{tpu_custom_call.1} parent=15 // pred_region
          %s119 = sand.u32 %s29, 1
          %s120 = scalar_lea.sflag [#allocation5], %s119
          %s121 = sand.u32 %s29, 1
          %s122 = smul.addr %s121, 8
          %s123 = scalar_lea.vmem [#allocation4], %s122
          %s125 = ssub.s32 128, 128
          %126 = vsyncadd %s120, %s125
          %s127 = smul.addr %s19, 128
          %s128 = scalar_lea.hbm %s1, %s127
          %s130 = sshll.u32 %s123, 4
          %s131 = int_to_ptr.vmem [resolvable:$true] %s130
          %133 = dma.hbm_to_vmem [thread:$0]  %s128, 128, %s131, %s120
        $region20: #{tpu_custom_call.1} parent=15 // pred_fallthru
          _
        // Predicated region
        $region21: #{tpu_custom_call.1} parent=15 // pred_check
          %p134 = pneg %p65
        $region22: #{tpu_custom_call.1} parent=15 // pred_check_branch
          %136 = sbr.rel (%p134) target = $region24
        $region23: #{tpu_custom_call.1} parent=15 // pred_region
          %s137 = sand.u32 %s55, 1
          %s138 = scalar_lea.sflag [#allocation8], %s137
          %s139 = sand.u32 %s55, 1
          %s140 = smul.addr %s139, 8
          %s141 = scalar_lea.vmem [#allocation7], %s140
          %s143 = ssub.s32 128, 128
          %144 = vsyncadd %s138, %s143
          %s145 = smul.addr %s19, 128
          %s146 = scalar_lea.hbm %s2, %s145
          %s148 = sshll.u32 %s141, 4
          %s149 = int_to_ptr.vmem [resolvable:$true] %s148
          %151 = dma.hbm_to_vmem [thread:$0]  %s146, 128, %s149, %s138
        $region24: #{tpu_custom_call.1} parent=15 // pred_fallthru
          _
      $region16: #{tpu_custom_call.1} parent=5 // pred_fallthru
        _
      %p152 = scmp.le.s32.totalorder 1, %s19
      %p153 = scmp.lt.s32.totalorder %s19, 3
      %p154 = pnand %p152, %p153
      %p155 = pneg %p154
      // Predicated region
      $region25: #{tpu_custom_call.1} parent=5 // pred_check
        _
      $region26: #{tpu_custom_call.1} parent=5 // pred_check_branch
        %157 = sbr.rel (%p154) target = $region28
      $region27: #{tpu_custom_call.1} parent=5 // pred_region
        %s158 = ssub.s32 %s19, 1
        %s159 = sand.u32 %s32, 1
        %s160 = scalar_lea.sflag [#allocation5], %s159
        %s161 = sand.u32 %s32, 1
        %s162 = smul.addr %s161, 8
        %s163 = scalar_lea.vmem [#allocation4], %s162
        // Predicated region
        $region29: #{tpu_custom_call.1} parent=27 // pred_check
          %p164 = pneg %p45
        $region30: #{tpu_custom_call.1} parent=27 // pred_check_branch
          %166 = sbr.rel (%p164) target = $region32
        $region31: #{tpu_custom_call.1} parent=27 // pred_region
          %167 = dma.done %s160, 128
        $region32: #{tpu_custom_call.1} parent=27 // pred_fallthru
          _
        %s168 = sand.u32 %s58, 1
        %s169 = scalar_lea.sflag [#allocation8], %s168
        %s170 = sand.u32 %s58, 1
        %s171 = smul.addr %s170, 8
        %s172 = scalar_lea.vmem [#allocation7], %s171
        // Predicated region
        $region33: #{tpu_custom_call.1} parent=27 // pred_check
          %p173 = pneg %p71
        $region34: #{tpu_custom_call.1} parent=27 // pred_check_branch
          %175 = sbr.rel (%p173) target = $region36
        $region35: #{tpu_custom_call.1} parent=27 // pred_region
          %176 = dma.done %s169, 128
        $region36: #{tpu_custom_call.1} parent=27 // pred_fallthru
          _
        %s177 = sand.u32 %s32, 1
        %s178 = scalar_lea.sflag [#allocation5], %s177
        %s179 = sand.u32 %s32, 1
        %s180 = smul.addr %s179, 8
        %s181 = scalar_lea.vmem [#allocation4], %s180
        %p182 = pneg %p45
        %p183 = pneg %p42
        %s184 = sand.u32 %s58, 1
        %s185 = scalar_lea.sflag [#allocation8], %s184
        %s186 = sand.u32 %s58, 1
        %s187 = smul.addr %s186, 8
        %s188 = scalar_lea.vmem [#allocation7], %s187
        %p189 = pneg %p71
        %p190 = pneg %p68
        %p191 = pneg %p97
        %p192 = pneg %p94
        %s193 = sand.u32 %s84, 1
        %s194 = scalar_lea.sflag [#allocation6], %s193
        %s195 = sand.u32 %s84, 1
        %s196 = smul.addr %s195, 8
        %s197 = scalar_lea.vmem [#allocation9], %s196
        %v198 = vld [vmem:[%s163] sm:$0xff]
        %v199 = vld [vmem:[%s172] sm:$0xff]
        %v200 = vadd.f32 %v198, %v199
        %vm201 = vcmask 523264
        %202 = vst.msk [vmem:[%s197] sm:$0xff] %vm201, %v200
        %s203 = sand.u32 %s84, 1
        %s204 = scalar_lea.sflag [#allocation6], %s203
        %s205 = sand.u32 %s84, 1
        %s206 = smul.addr %s205, 8
        %s207 = scalar_lea.vmem [#allocation9], %s206
        // Predicated region
        $region37: #{tpu_custom_call.1} parent=27 // pred_check
          %p208 = pneg %p94
        $region38: #{tpu_custom_call.1} parent=27 // pred_check_branch
          %210 = sbr.rel (%p208) target = $region40
        $region39: #{tpu_custom_call.1} parent=27 // pred_region
          %s212 = ssub.s32 128, 128
          %213 = vsyncadd %s204, %s212
          %s214 = smul.addr %s24, 128
          %s215 = scalar_lea.hbm %s3, %s214
          %s217 = sshll.u32 %s207, 4
          %s218 = int_to_ptr.vmem [resolvable:$true] %s217
          %220 = dma.vmem_to_hbm [thread:$0]  %s218, 128, %s215, %s204
        $region40: #{tpu_custom_call.1} parent=27 // pred_fallthru
          _
      $region28: #{tpu_custom_call.1} parent=5 // pred_fallthru
        _
      %p221 = scmp.le.s32.totalorder 2, %s19
      // Predicated region
      $region41: #{tpu_custom_call.1} parent=5 // pred_check
        %p222 = pneg %p221
      $region42: #{tpu_custom_call.1} parent=5 // pred_check_branch
        %224 = sbr.rel (%p222) target = $region44
      $region43: #{tpu_custom_call.1} parent=5 // pred_region
        %s225 = ssub.s32 %s19, 2
        // Predicated region
        $region45: #{tpu_custom_call.1} parent=43 // pred_check
          %p226 = pneg %p100
        $region46: #{tpu_custom_call.1} parent=43 // pred_check_branch
          %228 = sbr.rel (%p226) target = $region48
        $region47: #{tpu_custom_call.1} parent=43 // pred_region
          %s229 = sand.u32 %s85, 1
          %s230 = scalar_lea.sflag [#allocation6], %s229
          %s231 = sand.u32 %s85, 1
          %s232 = smul.addr %s231, 8
          %s233 = scalar_lea.vmem [#allocation9], %s232
          %234 = dma.done %s230, 128
        $region48: #{tpu_custom_call.1} parent=43 // pred_fallthru
          _
      $region44: #{tpu_custom_call.1} parent=5 // pred_fallthru
        _
    $region6: #{tpu_custom_call.1} parent=1 // loop_footer
      %s23 = sadd.s32 1, %s19
    $region7: #{tpu_custom_call.1} parent=1 // loop_footer_branch
      %18 = sbr.rel target = $region3
    $region8: #{tpu_custom_call.1} parent=1 // loop_exit
      _
    %235 = vsyncpa [#allocation5], 1
    %s236 = scalar_lea.sflag [#allocation5], 1
    %237 = vsyncpa %s236, 1
    %238 = vsyncpa [#allocation8], 1
    %s239 = scalar_lea.sflag [#allocation8], 1
    %240 = vsyncpa %s239, 1
    %241 = vsyncpa [#allocation6], 1
    %s242 = scalar_lea.sflag [#allocation6], 1
    %243 = vsyncpa %s242, 1

</llo_original>
